<compile_context>
chip_gen: v7x
topology: tpu7x:2x2x1
jax: 0.10.0
libtpu: 0.0.40
codegen_flags: <defaults>
</compile_context>

<pallas_src>
import functools

import jax
import jax.numpy as jnp
from jax.experimental import pallas as pl
from jax.experimental.pallas import tpu as pltpu


_LANES = 1024  # last dim, multiple of 128 -> unmasked vector stores


def _pick_tile_rows():
    """Rows per (tile_rows, _LANES) f32 block, chosen per TPU generation."""
    try:
        kind = jax.devices()[0].device_kind.lower()
    except Exception:
        return 1024
    if "v5" in kind:   # v5e: ~0.82 TB/s, 16 MiB default scoped VMEM -> 2 MiB blocks
        return 512
    if "7" in kind:    # v7x: ~3.2 TB/s -> 8 MiB blocks amortize per-step overhead
        return 2048
    return 1024        # v6e and others: 4 MiB blocks (~86% of HBM roofline)


_TILE_ROWS = _pick_tile_rows()
# Below this element count, plain JAX beats kernel launch + DMA setup.
_MIN_PALLAS_ELEMS = 64 * _LANES


def _linreg_kernel(w_ref, b_ref, x_ref, o_ref):
    # w_ref, b_ref: (1,) f32 scalars in SMEM.
    # x_ref, o_ref: (tile_rows, _LANES) f32 tiles in VMEM (auto-pipelined).
    w = w_ref[0]
    b = b_ref[0]
    o_ref[...] = x_ref[...] * w + b


def _linreg_pallas_2d(x2d, w_scalar, b_scalar, *, donate_input):
    """Tiled affine map over a lane-dense (rows, _LANES) f32 array."""
    rows, lanes = x2d.shape
    assert lanes == _LANES
    # tile_rows is either a multiple of 8 (512/1024/2048) or equal to the full
    # row extent, so the (8,128) BlockSpec rule is satisfied and a ragged
    # trailing grid block is legal (its OOB stores are masked by Pallas).
    tile_rows = min(_TILE_ROWS, rows)
    grid = (pl.cdiv(rows, tile_rows),)
    block_bytes = tile_rows * _LANES * 4
    # in + out, double-buffered, plus headroom; capped under v7x's 64 MiB.
    vmem_limit = min(48 << 20, 4 * block_bytes + (8 << 20))
    return pl.pallas_call(
        _linreg_kernel,
        out_shape=jax.ShapeDtypeStruct((rows, lanes), jnp.float32),
        grid=grid,
        in_specs=[
            pl.BlockSpec(memory_space=pltpu.MemorySpace.SMEM),    # weight scalar
            pl.BlockSpec(memory_space=pltpu.MemorySpace.SMEM),    # bias scalar
            pl.BlockSpec((tile_rows, _LANES), lambda i: (i, 0)),  # x tile
        ],
        out_specs=pl.BlockSpec((tile_rows, _LANES), lambda i: (i, 0)),
        compiler_params=pltpu.CompilerParams(
            dimension_semantics=("parallel",),  # shard tiles across TCs (v7x)
            vmem_limit_bytes=vmem_limit,
        ),
        # Only alias when x2d is a freshly padded temp; aliasing a view of the
        # caller's (non-donated) input would force XLA to insert a copy.
        input_output_aliases={2: 0} if donate_input else {},
    )(w_scalar, b_scalar, x2d)


@functools.partial(jax.jit, static_argnames=("force_pallas",))
def linear_regression_forward(x, weight, bias, *, force_pallas=False):
    """Equivalent of LinearRegression.forward: out = x @ W^T + b.

    x:      (..., 1) float32   (nn.Linear(1, 1) applied over the last dim)
    weight: (1, 1)   float32
    bias:   (1,)     float32
    returns same shape as x, float32.
    """
    orig_shape = x.shape
    assert orig_shape[-1] == 1, "LinearRegression expects in_features == 1"

    x = x.astype(jnp.float32)
    w_scalar = weight.reshape((1,)).astype(jnp.float32)
    b_scalar = bias.reshape((1,)).astype(jnp.float32)

    n = x.size
    if n < _MIN_PALLAS_ELEMS and not force_pallas:
        # Tiny input: kernel launch + DMA setup dwarfs the actual work.
        return (x * w_scalar[0] + b_scalar[0]).reshape(orig_shape)

    # Lane-dense repack.  Lane-aligned N (multiple of _LANES) is a pure
    # reshape in and out -- zero extra HBM passes.  Ragged N pads by fewer
    # than _LANES elements (pad granularity is one lane row, not a whole
    # multi-MiB tile) and slices the tail off afterwards.
    flat = x.reshape((-1,))
    rows = pl.cdiv(n, _LANES)
    padded = rows * _LANES
    needs_pad = padded != n
    if needs_pad:
        flat = jnp.pad(flat, (0, padded - n))
    x2d = flat.reshape((rows, _LANES))

    out2d = _linreg_pallas_2d(x2d, w_scalar, b_scalar, donate_input=needs_pad)
    if needs_pad:
        return out2d.reshape((-1,))[:n].reshape(orig_shape)
    return out2d.reshape(orig_shape)


if __name__ == "__main__":
    key = jax.random.PRNGKey(0)
    kx, kw, kb, kx2, kx3 = jax.random.split(key, 5)

    # nn.Linear(1, 1) parameters: weight (1, 1), bias (1,).
    weight = jax.random.uniform(kw, (1, 1), dtype=jnp.float32, minval=-1.0, maxval=1.0)
    bias = jax.random.uniform(kb, (1,), dtype=jnp.float32, minval=-1.0, maxval=1.0)

    # Small batch (module's typical (N, 1) input).  Force the Pallas path so
    # the kernel itself is exercised even at this size.
    x_small = jax.random.normal(kx, (8, 1), dtype=jnp.float32)
    out_small = jax.block_until_ready(
        linear_regression_forward(x_small, weight, bias, force_pallas=True))
    ref_small = x_small @ weight.T + bias
    assert out_small.shape == x_small.shape
    assert jnp.allclose(out_small, ref_small, atol=1e-6, rtol=1e-6)

    # Default (auto) path on the tiny input (plain-JAX guard).
    out_auto = jax.block_until_ready(linear_regression_forward(x_small, weight, bias))
    assert jnp.allclose(out_auto, ref_small, atol=1e-6, rtol=1e-6)

    # Lane-aligned N that is NOT tile-aligned: zero-copy reshape path plus a
    # ragged final grid block (exercises Pallas' masked partial-block stores).
    n_aligned = (3 * _TILE_ROWS // 2) * _LANES
    x_aligned = jax.random.normal(kx2, (n_aligned, 1), dtype=jnp.float32)
    out_aligned = jax.block_until_ready(
        linear_regression_forward(x_aligned, weight, bias))
    ref_aligned = x_aligned @ weight.T + bias
    assert out_aligned.shape == (n_aligned, 1)
    assert jnp.allclose(out_aligned, ref_aligned, atol=1e-5, rtol=1e-5)

    # Ragged N (neither lane- nor tile-aligned): small pad path, >1 grid step,
    # partial last block, and the donated padded temp.
    n_ragged = _TILE_ROWS * _LANES + 12345
    x_ragged = jax.random.normal(kx3, (n_ragged, 1), dtype=jnp.float32)
    out_ragged = jax.block_until_ready(
        linear_regression_forward(x_ragged, weight, bias))
    ref_ragged = x_ragged @ weight.T + bias
    assert out_ragged.shape == (n_ragged, 1)
    assert jnp.allclose(out_ragged, ref_ragged, atol=1e-5, rtol=1e-5)

    print("KERNEL_OK")
</pallas_src>

<mosaic_0001>
module attributes {stable_mosaic.version = 11 : i64} {
  func.func @_linreg_kernel(%arg0: i32, %arg1: memref<1xf32, #tpu.memory_space<smem>>, %arg2: memref<1xf32, #tpu.memory_space<smem>>, %arg3: memref<1x1024xf32, #tpu.memory_space<vmem>>, %arg4: memref<1x1024xf32, #tpu.memory_space<vmem>>) attributes {dimension_semantics = [#tpu.dimension_semantics<parallel>], iteration_bounds = array<i64: 1>, scalar_prefetch = 0 : i64, scratch_operands = 0 : i64, tpu.core_type = #tpu.core_type<tc>, window_params = [{transform_indices = @transform_0, window_bounds = array<i64: 1>}, {transform_indices = @transform_1, window_bounds = array<i64: 1>}, {transform_indices = @transform_2, window_bounds = array<i64: 1, 1024>}, {transform_indices = @transform_3, window_bounds = array<i64: 1, 1024>}]} {
    %c0 = arith.constant 0 : index
    %0 = memref.load %arg1[%c0] : memref<1xf32, #tpu.memory_space<smem>>
    %c0_0 = arith.constant 0 : index
    %1 = memref.load %arg2[%c0_0] : memref<1xf32, #tpu.memory_space<smem>>
    %c0_1 = arith.constant 0 : index
    %c0_2 = arith.constant 0 : index
    %2 = vector.load %arg3[%c0_1, %c0_2] : memref<1x1024xf32, #tpu.memory_space<vmem>>, vector<1x1024xf32>
    %3 = vector.broadcast %0 : f32 to vector<1x1024xf32>
    %4 = arith.mulf %2, %3 : vector<1x1024xf32>
    %5 = vector.broadcast %1 : f32 to vector<1x1024xf32>
    %6 = arith.addf %4, %5 : vector<1x1024xf32>
    %c0_3 = arith.constant 0 : index
    %c0_4 = arith.constant 0 : index
    %7 = vector.load %arg4[%c0_3, %c0_4] : memref<1x1024xf32, #tpu.memory_space<vmem>>, vector<1x1024xf32>
    tpu.vector_store %arg4[%c0_3, %c0_4], %6 {strides = array<i32>} : memref<1x1024xf32, #tpu.memory_space<vmem>>, vector<1x1024xf32>,
    return
  }
  func.func @transform_0(%arg0: i32) -> i32 {
    %c0_i32 = arith.constant 0 : i32
    %c0_i32_0 = arith.constant 0 : i32
    return %c0_i32 : i32
  }
  func.func @transform_1(%arg0: i32) -> i32 {
    %c0_i32 = arith.constant 0 : i32
    %c0_i32_0 = arith.constant 0 : i32
    return %c0_i32 : i32
  }
  func.func @transform_2(%arg0: i32) -> (i32, i32) {
    %c0_i32 = arith.constant 0 : i32
    %c0_i32_0 = arith.constant 0 : i32
    return %arg0, %c0_i32 : i32, i32
  }
  func.func @transform_3(%arg0: i32) -> (i32, i32) {
    %c0_i32 = arith.constant 0 : i32
    %c0_i32_0 = arith.constant 0 : i32
    return %arg0, %c0_i32 : i32, i32
  }
}

</mosaic_0001>

<llo_original>
// kernel: linear_regression_forward.1
$region0: #{linear_regression_forward.1}
  #allocation0 [shape = 'u32[]', space=smem, size = 0x4, offset = 0x4, fixed_abs, tag = 'smem constant byte address 0x4 - core index']
  #allocation1 [shape = 'u32[144,128]{1,0:T(1,128)}', space=vmem, size = 0x12000, scoped, tag = 'internal scratch']
  #allocation2 [shape = 'f32[1]{0:T(128)S(6)}', space=smem, size = 0x200, scoped, tag = 'scoped memory for linear_regression_forward.1']
  #allocation3 [shape = 'f32[1]{0:T(128)S(6)}', space=smem, size = 0x200, scoped, tag = 'scoped memory for linear_regression_forward.1']
  %s0 = inlined_call_operand.<no memory space> [shape: f32[1], index: 0, kind: input, shape index: {}]
  %s1 = inlined_call_operand.<no memory space> [shape: f32[1], index: 1, kind: input, shape index: {}]
  %s2 = inlined_call_operand.vmem [shape: f32[1,1024], index: 2, kind: input, shape index: {}, may-alias: {2,3}]
  %s3 = inlined_call_operand.vmem [shape: f32[1,1024], index: 3, kind: output, shape index: {}, may-alias: {2,3}]
  %s4 = sld [smem:[#allocation0]]
  $region22: #{linear_regression_forward.1} parent=0
    _
  %s6 = ssub.s32 1, %s4
  %s7 = scalar_select 0, %s6, %s4
  %8 = sst [smem:[#allocation2]] %s0
  %9 = sst [smem:[#allocation3]] %s1
  // Predicated region
  $region2: #{linear_regression_forward.1} parent=0 // pred_check
    _
  $region3: #{linear_regression_forward.1} parent=0 // pred_check_branch
    %11 = sbr.rel (0) target = $region5
  $region4: #{linear_regression_forward.1} parent=0 // pred_region
    _
  $region5: #{linear_regression_forward.1} parent=0 // pred_fallthru
    _
  // Predicated region
  $region6: #{linear_regression_forward.1} parent=0 // pred_check
    _
  $region7: #{linear_regression_forward.1} parent=0 // pred_check_branch
    %13 = sbr.rel (0) target = $region9
  $region8: #{linear_regression_forward.1} parent=0 // pred_region
    _
  $region9: #{linear_regression_forward.1} parent=0 // pred_fallthru
    _
  // Predicated region
  $region10: #{linear_regression_forward.1} parent=0 // pred_check
    _
  $region11: #{linear_regression_forward.1} parent=0 // pred_check_branch
    %15 = sbr.rel (0) target = $region13
  $region12: #{linear_regression_forward.1} parent=0 // pred_region
    _
  $region13: #{linear_regression_forward.1} parent=0 // pred_fallthru
    _
  %s16 = sld [smem:[#allocation2]]
  %s17 = sld [smem:[#allocation3]]
  %v18 = vld [vmem:[%s2] sm:$0xff]
  %v19 = vstv %s16
  %v20 = vmul.f32 %v18, %v19
  %v21 = vstv %s17
  %v22 = vadd.f32 %v20, %v21
  %23 = vst [vmem:[%s3] sm:$0xff] %v22
  // Predicated region
  $region14: #{linear_regression_forward.1} parent=0 // pred_check
    _
  $region15: #{linear_regression_forward.1} parent=0 // pred_check_branch
    %25 = sbr.rel (0) target = $region17
  $region16: #{linear_regression_forward.1} parent=0 // pred_region
    _
  $region17: #{linear_regression_forward.1} parent=0 // pred_fallthru
    _
  // Predicated region
  $region18: #{linear_regression_forward.1} parent=0 // pred_check
    _
  $region19: #{linear_regression_forward.1} parent=0 // pred_check_branch
    %27 = sbr.rel (0) target = $region21
  $region20: #{linear_regression_forward.1} parent=0 // pred_region
    _
  $region21: #{linear_regression_forward.1} parent=0 // pred_fallthru
    _

</llo_original>
